<compile_context>
chip_gen: v5e
topology: v5e:2x2
jax: 0.10.0
libtpu: 0.0.40
codegen_flags: <defaults>
</compile_context>

<pallas_src>
import functools

import jax
import jax.numpy as jnp
from jax.experimental import pallas as pl
from jax.experimental.pallas import tpu as pltpu


def _round_up(x, m):
    return (x + m - 1) // m * m


# ---------------------------------------------------------------------------
# One-time, cached chip/capability queries (never re-probed per call).
# ---------------------------------------------------------------------------
@functools.lru_cache(maxsize=None)
def _chip_caps():
    """Returns (vmem_capacity_bytes, is_v7x)."""
    kind = ""
    try:
        kind = jax.devices()[0].device_kind.lower()
    except Exception:
        pass
    is_v7x = ("v7" in kind) or ("7x" in kind)
    vmem_cap = None
    try:
        vmem_cap = int(pltpu.get_tpu_info().vmem_capacity_bytes)
    except Exception:
        vmem_cap = None
    if not vmem_cap or vmem_cap <= 0:
        vmem_cap = (64 << 20) if is_v7x else (128 << 20)
    return vmem_cap, is_v7x


@functools.lru_cache(maxsize=None)
def _single_buffer_supported():
    """One-time check that pl.Buffered(1) single-buffering lowers/compiles."""
    try:
        spec = pl.BlockSpec((8, 128), lambda i: (0, 0),
                            pipeline_mode=pl.Buffered(1))

        def _k(a_ref, o_ref):
            o_ref[...] = a_ref[...]

        fn = pl.pallas_call(
            _k,
            out_shape=jax.ShapeDtypeStruct((8, 128), jnp.float32),
            grid=(1,),
            in_specs=[spec],
            out_specs=pl.BlockSpec((8, 128), lambda i: (0, 0)),
        )
        jax.jit(fn).lower(
            jax.ShapeDtypeStruct((8, 128), jnp.float32)).compile()
        return True
    except Exception:
        return False


# ---------------------------------------------------------------------------
# Kernels
# ---------------------------------------------------------------------------
def _mlp_kernel_fused(x_ref, w1_ref, b1_ref, w2_ref, b2_ref, o_ref):
    # [bm, E] @ [E, H] -> f32 (bf16 MXU operands, f32 accumulation).
    h = jnp.dot(x_ref[...], w1_ref[...], preferred_element_type=jnp.float32)
    h = jnp.maximum(h + b1_ref[...], 0.0)            # bias + ReLU in f32 (VPU)
    # [bm, H] @ [H, E] -> f32; downcast only at the second dot.
    o = jnp.dot(h.astype(w2_ref.dtype), w2_ref[...],
                preferred_element_type=jnp.float32)
    o_ref[...] = (o + b2_ref[...]).astype(o_ref.dtype)


def _mlp_kernel_htiled(x_ref, w1_ref, b1_ref, w2_ref, b2_ref, o_ref, acc_ref):
    hi = pl.program_id(1)

    @pl.when(hi == 0)
    def _():
        acc_ref[...] = jnp.zeros_like(acc_ref)

    # Per-H-tile: b1 + ReLU is exact because ReLU is elementwise over H.
    h = jnp.dot(x_ref[...], w1_ref[...], preferred_element_type=jnp.float32)
    h = jnp.maximum(h + b1_ref[...], 0.0)
    acc_ref[...] += jnp.dot(h.astype(w2_ref.dtype), w2_ref[...],
                            preferred_element_type=jnp.float32)

    @pl.when(hi == pl.num_programs(1) - 1)
    def _():
        o_ref[...] = (acc_ref[...] + b2_ref[...]).astype(o_ref.dtype)


# ---------------------------------------------------------------------------
# Tile selection (generation-aware) and pallas_call builders
# ---------------------------------------------------------------------------
def _pick_bh(H_pad, target):
    """Largest multiple of 128 that divides H_pad and is <= target."""
    best = 128
    for k in range(1, H_pad // 128 + 1):
        cand = k * 128
        if H_pad % cand == 0 and cand <= target:
            best = cand
    return best


def _select_tiles(M, E_pad, H_pad, out_dtype, param_dtype):
    vmem_cap, is_v7x = _chip_caps()
    bpe_w = jnp.dtype(param_dtype).itemsize
    bpe_o = jnp.dtype(out_dtype).itemsize
    budget = int(0.35 * vmem_cap)

    # bf16 packs 16 rows per sublane group -> 16-aligned M tiles.
    M16 = _round_up(max(M, 16), 16)
    default_bm = 256 if is_v7x else 512
    bm = min(default_bm, M16)
    # Only v7x has two TensorCores worth splitting an otherwise single-step
    # M axis for; on v5e/v6e the grid is a serial loop so keep one big tile.
    if is_v7x and (M16 // bm) < 2 and M16 >= 32:
        bm = _round_up(pl.cdiv(M16, 2), 16)

    def fused_need(bm_):
        return (2 * bm_ * E_pad * bpe_w          # x double buffer
                + 2 * bm_ * E_pad * bpe_o        # out double buffer
                + 2 * E_pad * H_pad * bpe_w      # W1 + W2 resident
                + (E_pad + H_pad) * 4            # biases (f32)
                + bm_ * H_pad * 4)               # f32 intermediate

    weights_bytes = 2 * E_pad * H_pad * bpe_w
    use_htile = (weights_bytes + bm * H_pad * 4) > budget

    bh = H_pad
    if use_htile:
        bm = min(bm, 256)                        # MXU-friendly on all gens
        bh = _pick_bh(H_pad, max(128, min(H_pad, 512)))

        def htile_need(bm_, bh_):
            return (2 * bm_ * E_pad * bpe_w      # x double buffer
                    + 2 * bm_ * E_pad * bpe_o    # out double buffer
                    + 2 * 2 * E_pad * bh_ * bpe_w  # W1/W2 tiles, double buf
                    + 2 * bh_ * 4 + E_pad * 4    # biases
                    + bm_ * E_pad * 4            # f32 accumulator scratch
                    + bm_ * bh_ * 4)             # f32 intermediate

        while bh > 128 and htile_need(bm, bh) > budget:
            bh = _pick_bh(H_pad, bh - 128)
        while bm > 16 and htile_need(bm, bh) > budget:
            bm = max(16, _round_up(bm // 2, 16))
    else:
        while bm > 16 and fused_need(bm) > budget:
            bm = max(16, _round_up(bm // 2, 16))

    M_pad = _round_up(M16, bm)
    return M_pad, bm, bh, use_htile, vmem_cap


def _vmem_limit(need, vmem_cap):
    lim = max(32 << 20, 2 * need)
    lim = max(lim, need + (4 << 20))
    return int(min(lim, int(0.85 * vmem_cap)))


def _build_fused_call(M_pad, E_pad, H_pad, bm, out_dtype, param_dtype,
                      vmem_cap):
    grid = (M_pad // bm,)
    wkw = (dict(pipeline_mode=pl.Buffered(1))
           if _single_buffer_supported() else {})
    in_specs = [
        pl.BlockSpec((bm, E_pad), lambda i: (i, 0)),              # x tile
        pl.BlockSpec((E_pad, H_pad), lambda i: (0, 0), **wkw),    # W1
        pl.BlockSpec((1, H_pad), lambda i: (0, 0), **wkw),        # b1
        pl.BlockSpec((H_pad, E_pad), lambda i: (0, 0), **wkw),    # W2
        pl.BlockSpec((1, E_pad), lambda i: (0, 0), **wkw),        # b2
    ]
    out_specs = pl.BlockSpec((bm, E_pad), lambda i: (i, 0))

    bpe_w = jnp.dtype(param_dtype).itemsize
    bpe_o = jnp.dtype(out_dtype).itemsize
    wbuf = 1 if wkw else 2
    need = (2 * bm * E_pad * bpe_w + 2 * bm * E_pad * bpe_o
            + wbuf * 2 * E_pad * H_pad * bpe_w
            + wbuf * (E_pad + H_pad) * 4
            + 2 * bm * H_pad * 4)

    flops = 4 * M_pad * E_pad * H_pad
    bytes_accessed = (M_pad * E_pad * (bpe_w + bpe_o)
                      + 2 * E_pad * H_pad * bpe_w + (E_pad + H_pad) * 4)

    return pl.pallas_call(
        _mlp_kernel_fused,
        out_shape=jax.ShapeDtypeStruct((M_pad, E_pad), out_dtype),
        grid_spec=pltpu.PrefetchScalarGridSpec(
            num_scalar_prefetch=0, grid=grid,
            in_specs=in_specs, out_specs=out_specs),
        compiler_params=pltpu.CompilerParams(
            dimension_semantics=("parallel",),
            vmem_limit_bytes=_vmem_limit(need, vmem_cap)),
        cost_estimate=pl.CostEstimate(flops=flops, transcendentals=0,
                                      bytes_accessed=bytes_accessed),
    )


def _build_htiled_call(M_pad, E_pad, H_pad, bm, bh, out_dtype, param_dtype,
                       vmem_cap):
    grid = (M_pad // bm, H_pad // bh)
    b2kw = (dict(pipeline_mode=pl.Buffered(1))
            if _single_buffer_supported() else {})
    in_specs = [
        pl.BlockSpec((bm, E_pad), lambda i, h: (i, 0)),            # x tile
        pl.BlockSpec((E_pad, bh), lambda i, h: (0, h)),            # W1 tile
        pl.BlockSpec((1, bh), lambda i, h: (0, h)),                # b1 tile
        pl.BlockSpec((bh, E_pad), lambda i, h: (h, 0)),            # W2 tile
        pl.BlockSpec((1, E_pad), lambda i, h: (0, 0), **b2kw),     # b2
    ]
    out_specs = pl.BlockSpec((bm, E_pad), lambda i, h: (i, 0))

    bpe_w = jnp.dtype(param_dtype).itemsize
    bpe_o = jnp.dtype(out_dtype).itemsize
    need = (2 * bm * E_pad * bpe_w + 2 * bm * E_pad * bpe_o
            + 2 * 2 * E_pad * bh * bpe_w + 2 * bh * 4 + E_pad * 4
            + bm * E_pad * 4 + bm * bh * 4)

    flops = 4 * M_pad * E_pad * H_pad
    bytes_accessed = (M_pad * E_pad * (bpe_w + bpe_o)
                      + (M_pad // bm) * 2 * E_pad * H_pad * bpe_w
                      + (E_pad + H_pad) * 4)

    return pl.pallas_call(
        _mlp_kernel_htiled,
        out_shape=jax.ShapeDtypeStruct((M_pad, E_pad), out_dtype),
        grid_spec=pltpu.PrefetchScalarGridSpec(
            num_scalar_prefetch=0, grid=grid,
            in_specs=in_specs, out_specs=out_specs,
            scratch_shapes=[pltpu.VMEM((bm, E_pad), jnp.float32)]),
        compiler_params=pltpu.CompilerParams(
            dimension_semantics=("parallel", "arbitrary"),
            vmem_limit_bytes=_vmem_limit(need, vmem_cap)),
        cost_estimate=pl.CostEstimate(flops=flops, transcendentals=0,
                                      bytes_accessed=bytes_accessed),
    )


# ---------------------------------------------------------------------------
# Wrappers
# ---------------------------------------------------------------------------
def prepare_params(w1, b1, w2, b2, param_dtype=jnp.bfloat16):
    """Pad/cast parameters once (hoisted out of the per-call hot path).

    w1: [E, H] (= fc.weight.T), b1: [H] or [1, H],
    w2: [H, E] (= fo.weight.T), b2: [E] or [1, E].
    """
    E, H = w1.shape
    assert w2.shape == (H, E)
    b1 = jnp.asarray(b1).reshape(1, -1)
    b2 = jnp.asarray(b2).reshape(1, -1)
    E_pad = _round_up(E, 128)
    H_pad = _round_up(H, 128)

    def pad2(a, r, c, dt):
        a = a.astype(dt)
        if a.shape == (r, c):
            return a
        return jnp.zeros((r, c), dt).at[:a.shape[0], :a.shape[1]].set(a)

    w1p = pad2(w1, E_pad, H_pad, param_dtype)
    w2p = pad2(w2, H_pad, E_pad, param_dtype)
    b1p = pad2(b1, 1, H_pad, jnp.float32)
    b2p = pad2(b2, 1, E_pad, jnp.float32)
    return w1p, b1p, w2p, b2p


def mlp_pallas(x2d, w1p, b1p, w2p, b2p, *, out_dtype=None):
    """x2d: [M, E]; params already padded/cast via prepare_params."""
    M, E = x2d.shape
    E_pad, H_pad = w1p.shape
    param_dtype = w1p.dtype
    out_dtype = out_dtype or x2d.dtype

    M_pad, bm, bh, use_htile, vmem_cap = _select_tiles(
        M, E_pad, H_pad, out_dtype, param_dtype)

    # Pad + cast x only when needed (skip the copy entirely when aligned).
    xp = x2d.astype(param_dtype)
    if (M_pad, E_pad) != (M, E):
        xp = jnp.zeros((M_pad, E_pad), param_dtype).at[:M, :E].set(xp)

    if use_htile:
        call = _build_htiled_call(M_pad, E_pad, H_pad, bm, bh, out_dtype,
                                  param_dtype, vmem_cap)
    else:
        call = _build_fused_call(M_pad, E_pad, H_pad, bm, out_dtype,
                                 param_dtype, vmem_cap)
    out = call(xp, w1p, b1p, w2p, b2p)

    if (M_pad, E_pad) != (M, E):
        out = out[:M, :E]
    return out


def mlp_forward(x, w1p, b1p, w2p, b2p, *, out_dtype=None):
    """x: [..., E]; returns [..., E] (same leading shape)."""
    E = x.shape[-1]
    lead = x.shape[:-1]
    out = mlp_pallas(x.reshape(-1, E), w1p, b1p, w2p, b2p,
                     out_dtype=out_dtype)
    return out.reshape(*lead, out.shape[-1])


if __name__ == "__main__":
    embed_dim = 32
    mlp_dim = 64
    batch, seq = 2, 8  # M = 16 tokens

    key = jax.random.PRNGKey(0)
    kx, k1, kb1, k2, kb2 = jax.random.split(key, 5)

    x = jax.random.normal(kx, (batch, seq, embed_dim), dtype=jnp.float32)

    # Deterministic init, roughly matching nn.Linear scale.
    # Stored pre-transposed: w1 = fc.weight.T, w2 = fo.weight.T
    bound1 = 1.0 / (embed_dim ** 0.5)
    w1 = jax.random.uniform(k1, (embed_dim, mlp_dim), jnp.float32, -bound1, bound1)
    b1 = jax.random.uniform(kb1, (mlp_dim,), jnp.float32, -bound1, bound1)
    bound2 = 1.0 / (mlp_dim ** 0.5)
    w2 = jax.random.uniform(k2, (mlp_dim, embed_dim), jnp.float32, -bound2, bound2)
    b2 = jax.random.uniform(kb2, (embed_dim,), jnp.float32, -bound2, bound2)

    # Pad/cast params once, outside the hot path.
    w1p, b1p, w2p, b2p = prepare_params(w1, b1, w2, b2)

    # Warm the one-time capability caches, then jit the whole forward so the
    # x pad/cast fuses and there is no host sync inside the wrapper.
    _chip_caps()
    _single_buffer_supported()
    fwd = jax.jit(lambda xx: mlp_forward(xx, w1p, b1p, w2p, b2p))

    out = jax.block_until_ready(fwd(x))
    assert out.shape == (batch, seq, embed_dim)

    # Reference 1: emulate the kernel's bf16-operand / f32-accumulate path.
    pd = jnp.bfloat16
    xb = x.astype(pd)
    h_ref = jnp.dot(xb, w1.astype(pd), preferred_element_type=jnp.float32) + b1
    h_ref = jnp.maximum(h_ref, 0.0)
    ref_bf16 = jnp.dot(h_ref.astype(pd), w2.astype(pd),
                       preferred_element_type=jnp.float32) + b2
    assert jnp.allclose(out, ref_bf16, atol=1e-4, rtol=1e-4)

    # Reference 2: full-f32 PyTorch-equivalent forward (loose tolerance; the
    # kernel feeds bf16 operands to the MXU with f32 accumulation).
    ref_f32 = jnp.maximum(x @ w1 + b1, 0.0) @ w2 + b2
    assert jnp.allclose(out, ref_f32, atol=5e-2, rtol=5e-2)

    print("KERNEL_OK")
</pallas_src>

<mosaic_0001>
module attributes {stable_mosaic.version = 11 : i64} {
  func.func @_mlp_kernel_fused(%arg0: i32, %arg1: memref<16x128xbf16, #tpu.memory_space<vmem>>, %arg2: memref<128x128xbf16, #tpu.memory_space<vmem>>, %arg3: memref<1x128xf32, #tpu.memory_space<vmem>>, %arg4: memref<128x128xbf16, #tpu.memory_space<vmem>>, %arg5: memref<1x128xf32, #tpu.memory_space<vmem>>, %arg6: memref<16x128xf32, #tpu.memory_space<vmem>>) attributes {dimension_semantics = [#tpu.dimension_semantics<parallel>], iteration_bounds = array<i64: 1>, scalar_prefetch = 0 : i64, scratch_operands = 0 : i64, tpu.core_type = #tpu.core_type<tc>, window_params = [{transform_indices = @transform_0, window_bounds = array<i64: 16, 128>}, {pipeline_mode = #tpu.pipeline_mode<synchronous>, transform_indices = @transform_1, window_bounds = array<i64: 128, 128>}, {pipeline_mode = #tpu.pipeline_mode<synchronous>, transform_indices = @transform_2, window_bounds = array<i64: 1, 128>}, {pipeline_mode = #tpu.pipeline_mode<synchronous>, transform_indices = @transform_3, window_bounds = array<i64: 128, 128>}, {pipeline_mode = #tpu.pipeline_mode<synchronous>, transform_indices = @transform_4, window_bounds = array<i64: 1, 128>}, {transform_indices = @transform_5, window_bounds = array<i64: 16, 128>}]} {
    %c0 = arith.constant 0 : index
    %c0_0 = arith.constant 0 : index
    %0 = vector.load %arg1[%c0, %c0_0] : memref<16x128xbf16, #tpu.memory_space<vmem>>, vector<16x128xbf16>
    %c0_1 = arith.constant 0 : index
    %c0_2 = arith.constant 0 : index
    %1 = vector.load %arg2[%c0_1, %c0_2] : memref<128x128xbf16, #tpu.memory_space<vmem>>, vector<128x128xbf16>
    %cst = arith.constant dense<0.000000e+00> : vector<16x128xf32>
    %2 = tpu.matmul %0, %1, %cst {dimension_numbers = #tpu.dot_dimension_numbers<[1], [0], [0], [1], [0, 0, 1, 1], [], []>} : vector<16x128xbf16>, vector<128x128xbf16>, vector<16x128xf32> -> vector<16x128xf32>
    %c0_3 = arith.constant 0 : index
    %c0_4 = arith.constant 0 : index
    %3 = vector.load %arg3[%c0_3, %c0_4] : memref<1x128xf32, #tpu.memory_space<vmem>>, vector<1x128xf32>
    %4 = vector.broadcast %3 : vector<1x128xf32> to vector<16x128xf32>
    %5 = arith.addf %2, %4 : vector<16x128xf32>
    %cst_5 = arith.constant 0.000000e+00 : f32
    %6 = vector.broadcast %cst_5 : f32 to vector<16x128xf32>
    %7 = arith.maximumf %5, %6 : vector<16x128xf32>
    %8 = arith.truncf %7 : vector<16x128xf32> to vector<16x128xbf16>
    %c0_6 = arith.constant 0 : index
    %c0_7 = arith.constant 0 : index
    %9 = vector.load %arg4[%c0_6, %c0_7] : memref<128x128xbf16, #tpu.memory_space<vmem>>, vector<128x128xbf16>
    %cst_8 = arith.constant dense<0.000000e+00> : vector<16x128xf32>
    %10 = tpu.matmul %8, %9, %cst_8 {dimension_numbers = #tpu.dot_dimension_numbers<[1], [0], [0], [1], [0, 0, 1, 1], [], []>} : vector<16x128xbf16>, vector<128x128xbf16>, vector<16x128xf32> -> vector<16x128xf32>
    %c0_9 = arith.constant 0 : index
    %c0_10 = arith.constant 0 : index
    %11 = vector.load %arg5[%c0_9, %c0_10] : memref<1x128xf32, #tpu.memory_space<vmem>>, vector<1x128xf32>
    %12 = vector.broadcast %11 : vector<1x128xf32> to vector<16x128xf32>
    %13 = arith.addf %10, %12 : vector<16x128xf32>
    %c0_11 = arith.constant 0 : index
    %c0_12 = arith.constant 0 : index
    %14 = vector.load %arg6[%c0_11, %c0_12] : memref<16x128xf32, #tpu.memory_space<vmem>>, vector<16x128xf32>
    tpu.vector_store %arg6[%c0_11, %c0_12], %13 {strides = array<i32>} : memref<16x128xf32, #tpu.memory_space<vmem>>, vector<16x128xf32>,
    return
  }
  func.func @transform_0(%arg0: i32) -> (i32, i32) {
    %c0_i32 = arith.constant 0 : i32
    %c0_i32_0 = arith.constant 0 : i32
    return %arg0, %c0_i32 : i32, i32
  }
  func.func @transform_1(%arg0: i32) -> (i32, i32) {
    %c0_i32 = arith.constant 0 : i32
    %c0_i32_0 = arith.constant 0 : i32
    %c0_i32_1 = arith.constant 0 : i32
    return %c0_i32, %c0_i32_0 : i32, i32
  }
  func.func @transform_2(%arg0: i32) -> (i32, i32) {
    %c0_i32 = arith.constant 0 : i32
    %c0_i32_0 = arith.constant 0 : i32
    %c0_i32_1 = arith.constant 0 : i32
    return %c0_i32, %c0_i32_0 : i32, i32
  }
  func.func @transform_3(%arg0: i32) -> (i32, i32) {
    %c0_i32 = arith.constant 0 : i32
    %c0_i32_0 = arith.constant 0 : i32
    %c0_i32_1 = arith.constant 0 : i32
    return %c0_i32, %c0_i32_0 : i32, i32
  }
  func.func @transform_4(%arg0: i32) -> (i32, i32) {
    %c0_i32 = arith.constant 0 : i32
    %c0_i32_0 = arith.constant 0 : i32
    %c0_i32_1 = arith.constant 0 : i32
    return %c0_i32, %c0_i32_0 : i32, i32
  }
  func.func @transform_5(%arg0: i32) -> (i32, i32) {
    %c0_i32 = arith.constant 0 : i32
    %c0_i32_0 = arith.constant 0 : i32
    return %arg0, %c0_i32 : i32, i32
  }
}

</mosaic_0001>

<llo_original>
// kernel: _lambda_.1
$region0: #{_lambda_.1}
  #allocation0 [shape = 'u32[]', space=smem, size = 0x4, offset = 0x4, fixed_abs, tag = 'smem constant byte address 0x4 - core index']
  #allocation1 [shape = 'u32[72,128]{1,0:T(1,128)}', space=vmem, size = 0x9000, scoped, tag = 'internal scratch']
  %s0 = inlined_call_operand.vmem [shape: bf16[16,128], index: 0, kind: input, shape index: {}]
  %s1 = inlined_call_operand.hbm [shape: bf16[128,128], index: 1, kind: input, shape index: {}]
  %s2 = inlined_call_operand.vmem [shape: f32[1,128], index: 2, kind: input, shape index: {}]
  %s3 = inlined_call_operand.hbm [shape: bf16[128,128], index: 3, kind: input, shape index: {}]
  %s4 = inlined_call_operand.vmem [shape: f32[1,128], index: 4, kind: input, shape index: {}]
  %s5 = inlined_call_operand.vmem [shape: f32[16,128], index: 5, kind: output, shape index: {}]
  %s6 = sld [smem:[#allocation0]]
  $region38: #{_lambda_.1} parent=0
    _
  %s8 = ssub.s32 1, %s6
  %s9 = scalar_select 0, %s8, %s6
  $region1: #{_lambda_.1} parent=0
    #allocation2 [shape = 'u8[32768]{0}', space=vmem, size = 0x8000, scoped, tag = 'input window, operand 1, single buffered']
    #allocation3 [shape = 's32[1]{0}', space=sflag, size = 0x4, scoped, tag = 'scoped memory for _lambda_.1']
    #allocation4 [shape = 'u8[32768]{0}', space=vmem, size = 0x8000, scoped, tag = 'input window, operand 3, single buffered']
    #allocation5 [shape = 's32[1]{0}', space=sflag, size = 0x4, scoped, tag = 'scoped memory for _lambda_.1']
    %10 = vsyncpa [#allocation3], 0
    %11 = vsyncpa [#allocation5], 0
    // Predicated region
    $region2: #{_lambda_.1} parent=1 // pred_check
      _
    $region3: #{_lambda_.1} parent=1 // pred_check_branch
      %13 = sbr.rel (0) target = $region5
    $region4: #{_lambda_.1} parent=1 // pred_region
      _
    $region5: #{_lambda_.1} parent=1 // pred_fallthru
      _
    // Predicated region
    $region6: #{_lambda_.1} parent=1 // pred_check
      _
    $region7: #{_lambda_.1} parent=1 // pred_check_branch
      %15 = sbr.rel (0) target = $region9
    $region8: #{_lambda_.1} parent=1 // pred_region
      %17 = vsyncadd [#allocation3], 0
      %s18 = sshll.u32 %s1, 4
      %s19 = int_to_ptr.hbm [resolvable:$true] %s18
      %s20 = sshll.u32 [#allocation2], 4
      %s21 = int_to_ptr.vmem [resolvable:$true] %s20
      %26 = dma.hbm_to_vmem [thread:$0]  %s19, 1024, %s21, [#allocation3], 64, 64, 4
    $region9: #{_lambda_.1} parent=1 // pred_fallthru
      _
    // Predicated region
    $region10: #{_lambda_.1} parent=1 // pred_check
      _
    $region11: #{_lambda_.1} parent=1 // pred_check_branch
      %28 = sbr.rel (0) target = $region13
    $region12: #{_lambda_.1} parent=1 // pred_region
      _
    $region13: #{_lambda_.1} parent=1 // pred_fallthru
      _
    // Predicated region
    $region14: #{_lambda_.1} parent=1 // pred_check
      _
    $region15: #{_lambda_.1} parent=1 // pred_check_branch
      %30 = sbr.rel (0) target = $region17
    $region16: #{_lambda_.1} parent=1 // pred_region
      %32 = vsyncadd [#allocation5], 0
      %s33 = sshll.u32 %s3, 4
      %s34 = int_to_ptr.hbm [resolvable:$true] %s33
      %s35 = sshll.u32 [#allocation4], 4
      %s36 = int_to_ptr.vmem [resolvable:$true] %s35
      %41 = dma.hbm_to_vmem [thread:$0]  %s34, 1024, %s36, [#allocation5], 64, 64, 4
    $region17: #{_lambda_.1} parent=1 // pred_fallthru
      _
    // Predicated region
    $region18: #{_lambda_.1} parent=1 // pred_check
      _
    $region19: #{_lambda_.1} parent=1 // pred_check_branch
      %43 = sbr.rel (0) target = $region21
    $region20: #{_lambda_.1} parent=1 // pred_region
      _
    $region21: #{_lambda_.1} parent=1 // pred_fallthru
      _
    // Predicated region
    $region22: #{_lambda_.1} parent=1 // pred_check
      _
    $region23: #{_lambda_.1} parent=1 // pred_check_branch
      %45 = sbr.rel (0) target = $region25
    $region24: #{_lambda_.1} parent=1 // pred_region
      %47 = dma.done [#allocation3], 1024
    $region25: #{_lambda_.1} parent=1 // pred_fallthru
      _
    // Predicated region
    $region26: #{_lambda_.1} parent=1 // pred_check
      _
    $region27: #{_lambda_.1} parent=1 // pred_check_branch
      %49 = sbr.rel (0) target = $region29
    $region28: #{_lambda_.1} parent=1 // pred_region
      %51 = dma.done [#allocation5], 1024
    $region29: #{_lambda_.1} parent=1 // pred_fallthru
      _
    %v52 = vld [vmem:[%s0] sm:$0xf]
    %v53 = vld [vmem:[%s0 + $0x4] sm:$0xf]
    %v54 = vld [vmem:[#allocation2] sm:$0xf]
    %v55 = vld [vmem:[#allocation2 + $0x4] sm:$0xf]
    %v56 = vld [vmem:[#allocation2 + $0x8] sm:$0xf]
    %v57 = vld [vmem:[#allocation2 + $0xc] sm:$0xf]
    %v58 = vld [vmem:[#allocation2 + $0x10] sm:$0xf]
    %v59 = vld [vmem:[#allocation2 + $0x14] sm:$0xf]
    %v60 = vld [vmem:[#allocation2 + $0x18] sm:$0xf]
    %v61 = vld [vmem:[#allocation2 + $0x1c] sm:$0xf]
    %v62 = vld [vmem:[#allocation2 + $0x20] sm:$0xf]
    %v63 = vld [vmem:[#allocation2 + $0x24] sm:$0xf]
    %v64 = vld [vmem:[#allocation2 + $0x28] sm:$0xf]
    %v65 = vld [vmem:[#allocation2 + $0x2c] sm:$0xf]
    %v66 = vld [vmem:[#allocation2 + $0x30] sm:$0xf]
    %v67 = vld [vmem:[#allocation2 + $0x34] sm:$0xf]
    %v68 = vld [vmem:[#allocation2 + $0x38] sm:$0xf]
    %v69 = vld [vmem:[#allocation2 + $0x3c] sm:$0xf]
    %v70 = vld [vmem:[%s2] sm:$0x1]
    %v72 = vperm.slane %v70, 0
    %v76 = vunpack.c.l.b16 %v52
    %v77 = vunpack.c.l.b16 %v53
    %v78 = vpack.c.b16 %v77, %v76
    %v96 = vunpack.c.l.b16 %v54
    %v97 = vunpack.c.l.b16 %v55
    %v98 = vunpack.c.l.b16 %v56
    %v99 = vunpack.c.l.b16 %v57
    %v100 = vunpack.c.l.b16 %v58
    %v101 = vunpack.c.l.b16 %v59
    %v102 = vunpack.c.l.b16 %v60
    %v103 = vunpack.c.l.b16 %v61
    %v104 = vunpack.c.l.b16 %v62
    %v105 = vunpack.c.l.b16 %v63
    %v106 = vunpack.c.l.b16 %v64
    %v107 = vunpack.c.l.b16 %v65
    %v108 = vunpack.c.l.b16 %v66
    %v109 = vunpack.c.l.b16 %v67
    %v110 = vunpack.c.l.b16 %v68
    %v111 = vunpack.c.l.b16 %v69
    %v112 = vpack.c.b16 %v97, %v96
    %v113 = vpack.c.b16 %v99, %v98
    %v114 = vpack.c.b16 %v101, %v100
    %v115 = vpack.c.b16 %v103, %v102
    %v116 = vpack.c.b16 %v105, %v104
    %v117 = vpack.c.b16 %v107, %v106
    %v118 = vpack.c.b16 %v109, %v108
    %v119 = vpack.c.b16 %v111, %v110
    %128 = vmatpush.bf16.msra.mxu0 %v119
    %129 = vmatpush.bf16.msra.mxu0 %v118
    %130 = vmatpush.bf16.msra.mxu0 %v117
    %131 = vmatpush.bf16.msra.mxu0 %v116
    %132 = vmatpush.bf16.msra.mxu0 %v115
    %133 = vmatpush.bf16.msra.mxu0 %v114
    %134 = vmatpush.bf16.msra.mxu0 %v113
    %135 = vmatpush.bf16.msra.mxu0 %v112
    %136 = vmatmul.bf16.gmra.mxu0 %v78
    %v137 = vpop.f32.mrf.mxu0
    %v138 = vadd.f32 %v72, %v137
    %v139 = vpop.f32.mrf.mxu0
    %v140 = vadd.f32 %v72, %v139
    %141 = vdwg.mxu0
    %v142 = vmax.f32 %v138, 0.0
    %v143 = vmax.f32 %v140, 0.0
    %v144 = vpack.c.bf16 %v143, %v142
    %v145 = vld [vmem:[#allocation4] sm:$0xf]
    %v146 = vld [vmem:[#allocation4 + $0x4] sm:$0xf]
    %v147 = vld [vmem:[#allocation4 + $0x8] sm:$0xf]
    %v148 = vld [vmem:[#allocation4 + $0xc] sm:$0xf]
    %v149 = vld [vmem:[#allocation4 + $0x10] sm:$0xf]
    %v150 = vld [vmem:[#allocation4 + $0x14] sm:$0xf]
    %v151 = vld [vmem:[#allocation4 + $0x18] sm:$0xf]
    %v152 = vld [vmem:[#allocation4 + $0x1c] sm:$0xf]
    %v153 = vld [vmem:[#allocation4 + $0x20] sm:$0xf]
    %v154 = vld [vmem:[#allocation4 + $0x24] sm:$0xf]
    %v155 = vld [vmem:[#allocation4 + $0x28] sm:$0xf]
    %v156 = vld [vmem:[#allocation4 + $0x2c] sm:$0xf]
    %v157 = vld [vmem:[#allocation4 + $0x30] sm:$0xf]
    %v158 = vld [vmem:[#allocation4 + $0x34] sm:$0xf]
    %v159 = vld [vmem:[#allocation4 + $0x38] sm:$0xf]
    %v160 = vld [vmem:[#allocation4 + $0x3c] sm:$0xf]
    %v161 = vld [vmem:[%s4] sm:$0x1]
    %v163 = vperm.slane %v161, 0
    %v181 = vunpack.c.l.b16 %v145
    %v182 = vunpack.c.l.b16 %v146
    %v183 = vunpack.c.l.b16 %v147
    %v184 = vunpack.c.l.b16 %v148
    %v185 = vunpack.c.l.b16 %v149
    %v186 = vunpack.c.l.b16 %v150
    %v187 = vunpack.c.l.b16 %v151
    %v188 = vunpack.c.l.b16 %v152
    %v189 = vunpack.c.l.b16 %v153
    %v190 = vunpack.c.l.b16 %v154
    %v191 = vunpack.c.l.b16 %v155
    %v192 = vunpack.c.l.b16 %v156
    %v193 = vunpack.c.l.b16 %v157
    %v194 = vunpack.c.l.b16 %v158
    %v195 = vunpack.c.l.b16 %v159
    %v196 = vunpack.c.l.b16 %v160
    %v197 = vpack.c.b16 %v182, %v181
    %v198 = vpack.c.b16 %v184, %v183
    %v199 = vpack.c.b16 %v186, %v185
    %v200 = vpack.c.b16 %v188, %v187
    %v201 = vpack.c.b16 %v190, %v189
    %v202 = vpack.c.b16 %v192, %v191
    %v203 = vpack.c.b16 %v194, %v193
    %v204 = vpack.c.b16 %v196, %v195
    %213 = vmatpush.bf16.msra.mxu0 %v204
    %214 = vmatpush.bf16.msra.mxu0 %v203
    %215 = vmatpush.bf16.msra.mxu0 %v202
    %216 = vmatpush.bf16.msra.mxu0 %v201
    %217 = vmatpush.bf16.msra.mxu0 %v200
    %218 = vmatpush.bf16.msra.mxu0 %v199
    %219 = vmatpush.bf16.msra.mxu0 %v198
    %220 = vmatpush.bf16.msra.mxu0 %v197
    %221 = vmatmul.bf16.gmra.mxu0 %v144
    %v222 = vpop.f32.mrf.mxu0
    %v223 = vadd.f32 %v163, %v222
    %v224 = vpop.f32.mrf.mxu0
    %v225 = vadd.f32 %v163, %v224
    %226 = vdwg.mxu0
    %227 = vst [vmem:[%s5] sm:$0xff] %v223
    %228 = vst [vmem:[%s5 + $0x8] sm:$0xff] %v225
    // Predicated region
    $region30: #{_lambda_.1} parent=1 // pred_check
      _
    $region31: #{_lambda_.1} parent=1 // pred_check_branch
      %230 = sbr.rel (0) target = $region33
    $region32: #{_lambda_.1} parent=1 // pred_region
      _
    $region33: #{_lambda_.1} parent=1 // pred_fallthru
      _
    // Predicated region
    $region34: #{_lambda_.1} parent=1 // pred_check
      _
    $region35: #{_lambda_.1} parent=1 // pred_check_branch
      %232 = sbr.rel (0) target = $region37
    $region36: #{_lambda_.1} parent=1 // pred_region
      _
    $region37: #{_lambda_.1} parent=1 // pred_fallthru
      _
    %233 = vsyncpa [#allocation3], 1
    %234 = vsyncpa [#allocation5], 1

</llo_original>
